<compile_context>
chip_gen: v7x
topology: tpu7x:2x2x1
jax: 0.10.0
libtpu: 0.0.40
codegen_flags: <defaults>
</compile_context>

<pallas_src>
import math
import functools

import jax
import jax.numpy as jnp
from jax.experimental import pallas as pl
from jax.experimental.pallas import tpu as pltpu

_INV_SQRT2 = 1.0 / math.sqrt(2.0)


# ----------------------------------------------------------------------------
# Pallas kernel: Query_model forward (pool-first) + final L2 normalization
# ----------------------------------------------------------------------------
def _query_fdt_kernel(ft_ref, ln1_g, ln1_b, w1, b1, ln2_g, ln2_b, w2, b2, sd_ref,
                      attw_ref, attft_ref, hsum_ref,
                      *, scale, token_count, token_tile, needs_mask):
    t = pl.program_id(1)                         # token-tile axis (reduction, last)
    nt = pl.num_programs(1)

    @pl.when(t == 0)
    def _init():
        hsum_ref[...] = jnp.zeros_like(hsum_ref)

    ft = ft_ref[...]                             # [tB, tT, Dft] f32

    # --- q_map stage 1: LayerNorm(ft_dim) ---
    mu = jnp.mean(ft, axis=-1, keepdims=True)
    var = jnp.mean((ft - mu) ** 2, axis=-1, keepdims=True)
    x = (ft - mu) * jax.lax.rsqrt(var + 1e-5)
    x = x * ln1_g[...] + ln1_b[...]              # (1, Dft) broadcast

    # --- Linear(ft_dim, sd_dim): bf16 MXU inputs, f32 accumulation ---
    h = jnp.einsum('btd,de->bte', x.astype(jnp.bfloat16), w1[...],
                   preferred_element_type=jnp.float32) + b1[...]

    # --- GELU (exact erf form; matches torch.nn.GELU default) ---
    h = 0.5 * h * (1.0 + jax.lax.erf(h * _INV_SQRT2))

    # --- LayerNorm(sd_dim) ---
    mu2 = jnp.mean(h, axis=-1, keepdims=True)
    var2 = jnp.mean((h - mu2) ** 2, axis=-1, keepdims=True)
    h = (h - mu2) * jax.lax.rsqrt(var2 + 1e-5)
    h = h * ln2_g[...] + ln2_b[...]

    # --- mask padded token rows (only when T was padded to a tile multiple) ---
    if needs_mask:
        tok = jax.lax.broadcasted_iota(jnp.int32, (1, token_tile, 1), 1) \
              + t * token_tile
        h = jnp.where(tok < token_count, h, 0.0)

    # --- pool over the token axis BEFORE the second Linear / sd matmul ---
    hsum_ref[...] += jnp.sum(h, axis=1)          # [tB, Dsd] f32 accumulator

    @pl.when(t == nt - 1)
    def _finalize():
        sd = sd_ref[...]                         # [Nsd, Dsd] bf16 (resident)
        hsum = hsum_ref[...]                     # [tB, Dsd] f32

        # Linear(sd_dim, sd_dim) on the pooled tokens: + T * b2 by linearity.
        q = jnp.dot(hsum.astype(jnp.bfloat16), w2[...],
                    preferred_element_type=jnp.float32)
        q = q + jnp.float32(token_count) * b2[...]          # [tB, Dsd]

        # pooled inner_dot = q @ sd^T, with 1/(sqrt(Dsd)*temperature) folded in.
        pooled = jnp.einsum('bf,nf->bn', q.astype(jnp.bfloat16), sd,
                            preferred_element_type=jnp.float32)
        pooled = pooled * jnp.float32(scale)                # [tB, Nsd]

        # softmax over the FDT axis (full Nsd present -> single pass is valid).
        m = jnp.max(pooled, axis=-1, keepdims=True)
        e = jnp.exp(pooled - m)
        denom = jnp.sum(e, axis=-1, keepdims=True)
        attw = e * pl.reciprocal(denom, approx=True)        # EUP reciprocal

        # att_ft = att_weight @ sd
        attft = jnp.dot(attw.astype(jnp.bfloat16), sd,
                        preferred_element_type=jnp.float32)  # [tB, Dsd]

        # Clip_FDT.forward: L2 normalize with +1e-10 on the norm (like PyTorch).
        nrm = jnp.sqrt(jnp.sum(attft * attft, axis=-1, keepdims=True))
        attft = attft * pl.reciprocal(nrm + 1e-10, approx=True)

        attw_ref[...] = attw
        attft_ref[...] = attft


# ----------------------------------------------------------------------------
# Tiling helpers
# ----------------------------------------------------------------------------
def _choose_token_tile(T):
    """Return (token_tile, padded_T): tile is a multiple of 8 dividing padded_T."""
    t_pad = ((T + 7) // 8) * 8
    for cand in (512, 256, 128, 64, 32, 16, 8):
        if t_pad % cand == 0:
            return cand, t_pad
    return t_pad, t_pad


def _choose_batch_tile(B):
    if B % 8 == 0:
        for cand in (256, 128, 64, 32, 16, 8):
            if B % cand == 0:
                return cand
    return B  # full batch as one block (satisfies the full-dim escape hatch)


# ----------------------------------------------------------------------------
# Wrapper: one Query_model (+ final normalize) per pallas_call
# ----------------------------------------------------------------------------
def query_model_forward(ft, qp, space_dict, temperature):
    B, T, Dft = ft.shape
    Nsd, Dsd = space_dict.shape

    tB = _choose_batch_tile(B)
    tT, T_pad = _choose_token_tile(T)
    if T_pad != T:
        ft = jnp.pad(ft, ((0, 0), (0, T_pad - T), (0, 0)))
    nb = B // tB
    nt = T_pad // tT

    # bf16 MXU operands (halves HBM traffic / VMEM for weights & space_dict).
    w1 = qp['w1'].astype(jnp.bfloat16)
    w2 = qp['w2'].astype(jnp.bfloat16)
    sd = space_dict.astype(jnp.bfloat16)

    args = (ft, qp['ln1_g'], qp['ln1_b'], w1, qp['b1'],
            qp['ln2_g'], qp['ln2_b'], w2, qp['b2'], sd)

    scale = 1.0 / (math.sqrt(Dsd) * float(temperature))
    kernel = functools.partial(_query_fdt_kernel, scale=scale, token_count=T,
                               token_tile=tT, needs_mask=(T_pad != T))

    def resident(shape):
        n = len(shape)
        return pl.BlockSpec(shape, lambda b, t, _n=n: (0,) * _n)

    in_specs = [
        pl.BlockSpec((tB, tT, Dft), lambda b, t: (b, t, 0)),   # ft: streamed tile
        resident(qp['ln1_g'].shape), resident(qp['ln1_b'].shape),
        resident(w1.shape), resident(qp['b1'].shape),
        resident(qp['ln2_g'].shape), resident(qp['ln2_b'].shape),
        resident(w2.shape), resident(qp['b2'].shape),
        resident(sd.shape),
    ]
    out_specs = (pl.BlockSpec((tB, Nsd), lambda b, t: (b, 0)),
                 pl.BlockSpec((tB, Dsd), lambda b, t: (b, 0)))

    # TODO(synk): at production FDT sizes (Nsd~16k, Dsd~512) on v7x (64 MiB VMEM),
    # tile space_dict along sd_num with an online softmax and raise
    # vmem_limit_bytes; at these sizes the defaults are ample.
    attw, attft = pl.pallas_call(
        kernel,
        grid_spec=pltpu.PrefetchScalarGridSpec(
            num_scalar_prefetch=0,
            grid=(nb, nt),
            in_specs=in_specs,
            out_specs=out_specs,
            scratch_shapes=[pltpu.VMEM((tB, Dsd), jnp.float32)],
        ),
        out_shape=(jax.ShapeDtypeStruct((B, Nsd), jnp.float32),
                   jax.ShapeDtypeStruct((B, Dsd), jnp.float32)),
        compiler_params=pltpu.CompilerParams(
            dimension_semantics=("parallel", "arbitrary")),
    )(*args)
    return attw, attft


# ----------------------------------------------------------------------------
# Clip_FDT forward (glue in plain JAX)
# ----------------------------------------------------------------------------
def clip_fdt_forward(params, texts, images, acoustics, sd_temperature=1.0):
    # TODO(synk): the three modalities could be fused into one pallas_call (padding
    # ft_dim to a common max) so space_dict is DMA'd once instead of three times.
    attw_txt, sd_txt_ft = query_model_forward(texts, params['txt'],
                                              params['space_dict'], sd_temperature)
    attw_img, sd_img_ft = query_model_forward(images, params['img'],
                                              params['space_dict'], sd_temperature)
    attw_ac, sd_ac_ft = query_model_forward(acoustics, params['ac'],
                                            params['space_dict'], sd_temperature)
    # logit_scale.exp() clamped at 100 (the .data mutation is just a clamp)
    logit_scale = jnp.minimum(jnp.exp(params['logit_scale']), 100.0)
    return (sd_txt_ft, sd_img_ft, sd_ac_ft, logit_scale,
            (attw_txt, attw_img, attw_ac), params['space_dict'])


# ----------------------------------------------------------------------------
# Deterministic parameter initialization (synthetic, per __init__ shapes)
# ----------------------------------------------------------------------------
def init_query_params(key, ft_dim, sd_dim):
    k0, k1, k2, k3 = jax.random.split(key, 4)
    return {
        'ln1_g': jnp.ones((1, ft_dim), jnp.float32),
        'ln1_b': jnp.zeros((1, ft_dim), jnp.float32),
        'w1': jax.random.normal(k0, (ft_dim, sd_dim), jnp.float32)
              * (1.0 / math.sqrt(ft_dim)),
        'b1': jax.random.normal(k1, (1, sd_dim), jnp.float32) * 0.01,
        'ln2_g': jnp.ones((1, sd_dim), jnp.float32),
        'ln2_b': jnp.zeros((1, sd_dim), jnp.float32),
        'w2': jax.random.normal(k2, (sd_dim, sd_dim), jnp.float32)
              * (1.0 / math.sqrt(sd_dim)),
        'b2': jax.random.normal(k3, (1, sd_dim), jnp.float32) * 0.01,
    }


def init_clip_fdt_params(key, sd_num, sd_dim,
                         raw_img_ft_dim, raw_txt_ft_dim, raw_acoustic_ft_dim):
    k_sd, k_img, k_txt, k_ac = jax.random.split(key, 4)
    xavier_std = math.sqrt(2.0 / (sd_num + sd_dim))          # xavier_normal_
    return {
        'space_dict': jax.random.normal(k_sd, (sd_num, sd_dim), jnp.float32) * xavier_std,
        'img': init_query_params(k_img, raw_img_ft_dim, sd_dim),
        'txt': init_query_params(k_txt, raw_txt_ft_dim, sd_dim),
        'ac':  init_query_params(k_ac, raw_acoustic_ft_dim, sd_dim),
        'logit_scale': jnp.array(math.log(1.0 / 0.07), jnp.float32),
    }
    # TODO(synk): AllGather / encode_image / encode_text are not used in forward()
    # (inputs are already token features); distributed allgather is out of scope here.


# ----------------------------------------------------------------------------
# Demo
# ----------------------------------------------------------------------------
if __name__ == "__main__":
    key = jax.random.PRNGKey(0)
    kp, kt, ki, ka = jax.random.split(key, 4)

    # small, module-consistent shapes (sd dims kept at 128 so outputs are lane-dense)
    B = 2
    sd_num, sd_dim = 128, 128
    raw_txt_ft_dim, raw_img_ft_dim, raw_acoustic_ft_dim = 32, 48, 24
    T_txt, T_img, T_ac = 20, 48, 8   # exercises token padding/masking + multi-tile reduce

    params = init_clip_fdt_params(kp, sd_num, sd_dim,
                                  raw_img_ft_dim, raw_txt_ft_dim,
                                  raw_acoustic_ft_dim)

    texts = jax.random.normal(kt, (B, T_txt, raw_txt_ft_dim), jnp.float32)
    images = jax.random.normal(ki, (B, T_img, raw_img_ft_dim), jnp.float32)
    acoustics = jax.random.normal(ka, (B, T_ac, raw_acoustic_ft_dim), jnp.float32)

    out = clip_fdt_forward(params, texts, images, acoustics, sd_temperature=1.0)
    out = jax.block_until_ready(out)

    sd_txt_ft, sd_img_ft, sd_ac_ft, logit_scale, att_weights, space_dict = out
    assert sd_txt_ft.shape == (B, sd_dim)
    assert sd_img_ft.shape == (B, sd_dim)
    assert sd_ac_ft.shape == (B, sd_dim)
    assert att_weights[0].shape == (B, sd_num)
    assert att_weights[1].shape == (B, sd_num)
    assert att_weights[2].shape == (B, sd_num)
    assert space_dict.shape == (sd_num, sd_dim)

    # structural sanity: softmax rows sum to ~1, output features are ~unit-norm
    for ft_out, attw in zip((sd_txt_ft, sd_img_ft, sd_ac_ft), att_weights):
        assert bool(jnp.all(jnp.isfinite(ft_out)))
        assert bool(jnp.all(jnp.isfinite(attw)))
        assert bool(jnp.all(jnp.abs(jnp.sum(attw, axis=-1) - 1.0) < 2e-2))
        assert bool(jnp.all(jnp.abs(jnp.linalg.norm(ft_out, axis=-1) - 1.0) < 2e-2))

    print("KERNEL_OK")
</pallas_src>

<mosaic_0001>
module attributes {stable_mosaic.version = 11 : i64} {
  func.func @_query_fdt_kernel(%arg0: i32, %arg1: i32, %arg2: memref<2x8x32xf32, #tpu.memory_space<vmem>>, %arg3: memref<1x32xf32, #tpu.memory_space<vmem>>, %arg4: memref<1x32xf32, #tpu.memory_space<vmem>>, %arg5: memref<32x128xbf16, #tpu.memory_space<vmem>>, %arg6: memref<1x128xf32, #tpu.memory_space<vmem>>, %arg7: memref<1x128xf32, #tpu.memory_space<vmem>>, %arg8: memref<1x128xf32, #tpu.memory_space<vmem>>, %arg9: memref<128x128xbf16, #tpu.memory_space<vmem>>, %arg10: memref<1x128xf32, #tpu.memory_space<vmem>>, %arg11: memref<128x128xbf16, #tpu.memory_space<vmem>>, %arg12: memref<2x128xf32, #tpu.memory_space<vmem>>, %arg13: memref<2x128xf32, #tpu.memory_space<vmem>>, %arg14: memref<2x128xf32, #tpu.memory_space<vmem>>) attributes {dimension_semantics = [#tpu.dimension_semantics<parallel>, #tpu.dimension_semantics<arbitrary>], iteration_bounds = array<i64: 1, 3>, scalar_prefetch = 0 : i64, scratch_operands = 1 : i64, tpu.core_type = #tpu.core_type<tc>, window_params = [{transform_indices = @transform_0, window_bounds = array<i64: 2, 8, 32>}, {pipeline_mode = #tpu.pipeline_mode<synchronous>, transform_indices = @transform_1, window_bounds = array<i64: 1, 32>}, {pipeline_mode = #tpu.pipeline_mode<synchronous>, transform_indices = @transform_2, window_bounds = array<i64: 1, 32>}, {pipeline_mode = #tpu.pipeline_mode<synchronous>, transform_indices = @transform_3, window_bounds = array<i64: 32, 128>}, {pipeline_mode = #tpu.pipeline_mode<synchronous>, transform_indices = @transform_4, window_bounds = array<i64: 1, 128>}, {pipeline_mode = #tpu.pipeline_mode<synchronous>, transform_indices = @transform_5, window_bounds = array<i64: 1, 128>}, {pipeline_mode = #tpu.pipeline_mode<synchronous>, transform_indices = @transform_6, window_bounds = array<i64: 1, 128>}, {pipeline_mode = #tpu.pipeline_mode<synchronous>, transform_indices = @transform_7, window_bounds = array<i64: 128, 128>}, {pipeline_mode = #tpu.pipeline_mode<synchronous>, transform_indices = @transform_8, window_bounds = array<i64: 1, 128>}, {pipeline_mode = #tpu.pipeline_mode<synchronous>, transform_indices = @transform_9, window_bounds = array<i64: 128, 128>}, {transform_indices = @transform_10, window_bounds = array<i64: 2, 128>}, {transform_indices = @transform_11, window_bounds = array<i64: 2, 128>}]} {
    %c0_i32 = arith.constant 0 : i32
    %0 = arith.cmpi eq, %arg1, %c0_i32 : i32
    %1 = arith.extui %0 : i1 to i32
    %c0_i32_0 = arith.constant 0 : i32
    %2 = arith.cmpi ne, %1, %c0_i32_0 : i32
    scf.if %2 {
      %cst_35 = arith.constant 0.000000e+00 : f32
      %88 = vector.broadcast %cst_35 : f32 to vector<2x128xf32>
      %c0_36 = arith.constant 0 : index
      %c0_37 = arith.constant 0 : index
      %89 = vector.load %arg14[%c0_36, %c0_37] : memref<2x128xf32, #tpu.memory_space<vmem>>, vector<2x128xf32>
      tpu.vector_store %arg14[%c0_36, %c0_37], %88 {strides = array<i32>} : memref<2x128xf32, #tpu.memory_space<vmem>>, vector<2x128xf32>,
    } else {
    }
    %c0 = arith.constant 0 : index
    %c0_1 = arith.constant 0 : index
    %c0_2 = arith.constant 0 : index
    %3 = vector.load %arg2[%c0, %c0_1, %c0_2] : memref<2x8x32xf32, #tpu.memory_space<vmem>>, vector<2x8x32xf32>
    %cst = arith.constant dense<0.000000e+00> : vector<2x8xf32>
    %4 = vector.multi_reduction <add>, %3, %cst [2] : vector<2x8x32xf32> to vector<2x8xf32>
    %5 = vector.shape_cast %4 : vector<2x8xf32> to vector<2x8x1xf32>
    %cst_3 = arith.constant 3.200000e+01 : f32
    %6 = vector.broadcast %cst_3 : f32 to vector<2x8x1xf32>
    %7 = arith.divf %5, %6 : vector<2x8x1xf32>
    %8 = vector.broadcast %7 : vector<2x8x1xf32> to vector<2x8x32xf32>
    %9 = arith.subf %3, %8 : vector<2x8x32xf32>
    %10 = arith.mulf %9, %9 : vector<2x8x32xf32>
    %cst_4 = arith.constant dense<0.000000e+00> : vector<2x8xf32>
    %11 = vector.multi_reduction <add>, %10, %cst_4 [2] : vector<2x8x32xf32> to vector<2x8xf32>
    %12 = vector.shape_cast %11 : vector<2x8xf32> to vector<2x8x1xf32>
    %cst_5 = arith.constant 3.200000e+01 : f32
    %13 = vector.broadcast %cst_5 : f32 to vector<2x8x1xf32>
    %14 = arith.divf %12, %13 : vector<2x8x1xf32>
    %15 = vector.broadcast %7 : vector<2x8x1xf32> to vector<2x8x32xf32>
    %16 = arith.subf %3, %15 : vector<2x8x32xf32>
    %cst_6 = arith.constant 9.99999974E-6 : f32
    %17 = vector.broadcast %cst_6 : f32 to vector<2x8x1xf32>
    %18 = arith.addf %14, %17 : vector<2x8x1xf32>
    %19 = math.rsqrt %18 : vector<2x8x1xf32>
    %20 = vector.broadcast %19 : vector<2x8x1xf32> to vector<2x8x32xf32>
    %21 = arith.mulf %16, %20 : vector<2x8x32xf32>
    %c0_7 = arith.constant 0 : index
    %c0_8 = arith.constant 0 : index
    %22 = vector.load %arg3[%c0_7, %c0_8] : memref<1x32xf32, #tpu.memory_space<vmem>>, vector<1x32xf32>
    %23 = vector.shape_cast %22 : vector<1x32xf32> to vector<1x1x32xf32>
    %24 = vector.broadcast %23 : vector<1x1x32xf32> to vector<2x8x32xf32>
    %25 = arith.mulf %21, %24 : vector<2x8x32xf32>
    %c0_9 = arith.constant 0 : index
    %c0_10 = arith.constant 0 : index
    %26 = vector.load %arg4[%c0_9, %c0_10] : memref<1x32xf32, #tpu.memory_space<vmem>>, vector<1x32xf32>
    %27 = vector.shape_cast %26 : vector<1x32xf32> to vector<1x1x32xf32>
    %28 = vector.broadcast %27 : vector<1x1x32xf32> to vector<2x8x32xf32>
    %29 = arith.addf %25, %28 : vector<2x8x32xf32>
    %30 = arith.truncf %29 : vector<2x8x32xf32> to vector<2x8x32xbf16>
    %c0_11 = arith.constant 0 : index
    %c0_12 = arith.constant 0 : index
    %31 = vector.load %arg5[%c0_11, %c0_12] : memref<32x128xbf16, #tpu.memory_space<vmem>>, vector<32x128xbf16>
    "tpu.trace_start"() <{level = 10 : i32, message = "btd,de->bte"}> : () -> ()
    %cst_13 = arith.constant dense<0.000000e+00> : vector<2x8x128xf32>
    %32 = tpu.matmul %30, %31, %cst_13 {dimension_numbers = #tpu.dot_dimension_numbers<[2], [0], [0, 1], [1], [0, 0, 0, 1, 1, 1], [], []>} : vector<2x8x32xbf16>, vector<32x128xbf16>, vector<2x8x128xf32> -> vector<2x8x128xf32>
    "tpu.trace_stop"() : () -> ()
    %c0_14 = arith.constant 0 : index
    %c0_15 = arith.constant 0 : index
    %33 = vector.load %arg6[%c0_14, %c0_15] : memref<1x128xf32, #tpu.memory_space<vmem>>, vector<1x128xf32>
    %34 = vector.shape_cast %33 : vector<1x128xf32> to vector<1x1x128xf32>
    %35 = vector.broadcast %34 : vector<1x1x128xf32> to vector<2x8x128xf32>
    %36 = arith.addf %32, %35 : vector<2x8x128xf32>
    %cst_16 = arith.constant 5.000000e-01 : f32
    %37 = vector.broadcast %cst_16 : f32 to vector<2x8x128xf32>
    %38 = arith.mulf %37, %36 : vector<2x8x128xf32>
    %cst_17 = arith.constant 0.707106769 : f32
    %39 = vector.broadcast %cst_17 : f32 to vector<2x8x128xf32>
    %40 = arith.mulf %36, %39 : vector<2x8x128xf32>
    %41 = math.erf %40 : vector<2x8x128xf32>
    %cst_18 = arith.constant 1.000000e+00 : f32
    %42 = vector.broadcast %cst_18 : f32 to vector<2x8x128xf32>
    %43 = arith.addf %42, %41 : vector<2x8x128xf32>
    %44 = arith.mulf %38, %43 : vector<2x8x128xf32>
    %cst_19 = arith.constant dense<0.000000e+00> : vector<2x8xf32>
    %45 = vector.multi_reduction <add>, %44, %cst_19 [2] : vector<2x8x128xf32> to vector<2x8xf32>
    %46 = vector.shape_cast %45 : vector<2x8xf32> to vector<2x8x1xf32>
    %cst_20 = arith.constant 1.280000e+02 : f32
    %47 = vector.broadcast %cst_20 : f32 to vector<2x8x1xf32>
    %48 = arith.divf %46, %47 : vector<2x8x1xf32>
    %49 = vector.broadcast %48 : vector<2x8x1xf32> to vector<2x8x128xf32>
    %50 = arith.subf %44, %49 : vector<2x8x128xf32>
    %51 = arith.mulf %50, %50 : vector<2x8x128xf32>
    %cst_21 = arith.constant dense<0.000000e+00> : vector<2x8xf32>
    %52 = vector.multi_reduction <add>, %51, %cst_21 [2] : vector<2x8x128xf32> to vector<2x8xf32>
    %53 = vector.shape_cast %52 : vector<2x8xf32> to vector<2x8x1xf32>
    %cst_22 = arith.constant 1.280000e+02 : f32
    %54 = vector.broadcast %cst_22 : f32 to vector<2x8x1xf32>
    %55 = arith.divf %53, %54 : vector<2x8x1xf32>
    %56 = vector.broadcast %48 : vector<2x8x1xf32> to vector<2x8x128xf32>
    %57 = arith.subf %44, %56 : vector<2x8x128xf32>
    %cst_23 = arith.constant 9.99999974E-6 : f32
    %58 = vector.broadcast %cst_23 : f32 to vector<2x8x1xf32>
    %59 = arith.addf %55, %58 : vector<2x8x1xf32>
    %60 = math.rsqrt %59 : vector<2x8x1xf32>
    %61 = vector.broadcast %60 : vector<2x8x1xf32> to vector<2x8x128xf32>
    %62 = arith.mulf %57, %61 : vector<2x8x128xf32>
    %c0_24 = arith.constant 0 : index
    %c0_25 = arith.constant 0 : index
    %63 = vector.load %arg7[%c0_24, %c0_25] : memref<1x128xf32, #tpu.memory_space<vmem>>, vector<1x128xf32>
    %64 = vector.shape_cast %63 : vector<1x128xf32> to vector<1x1x128xf32>
    %65 = vector.broadcast %64 : vector<1x1x128xf32> to vector<2x8x128xf32>
    %66 = arith.mulf %62, %65 : vector<2x8x128xf32>
    %c0_26 = arith.constant 0 : index
    %c0_27 = arith.constant 0 : index
    %67 = vector.load %arg8[%c0_26, %c0_27] : memref<1x128xf32, #tpu.memory_space<vmem>>, vector<1x128xf32>
    %68 = vector.shape_cast %67 : vector<1x128xf32> to vector<1x1x128xf32>
    %69 = vector.broadcast %68 : vector<1x1x128xf32> to vector<2x8x128xf32>
    %70 = arith.addf %66, %69 : vector<2x8x128xf32>
    %71 = tpu.iota {dimensions = array<i32: 1>} : vector<1x8x1xi32>
    %c8_i32 = arith.constant 8 : i32
    %72 = arith.muli %arg1, %c8_i32 : i32
    %73 = vector.broadcast %72 : i32 to vector<1x8x1xi32>
    %74 = arith.addi %71, %73 : vector<1x8x1xi32>
    %c20_i32 = arith.constant 20 : i32
    %75 = vector.broadcast %c20_i32 : i32 to vector<1x8x1xi32>
    %76 = arith.cmpi slt, %74, %75 : vector<1x8x1xi32>
    %cst_28 = arith.constant 0.000000e+00 : f32
    %77 = vector.shape_cast %76 : vector<1x8x1xi1> to vector<1x8x1xi1>
    %78 = vector.broadcast %77 : vector<1x8x1xi1> to vector<2x8x128xi1>
    %79 = vector.broadcast %cst_28 : f32 to vector<2x8x128xf32>
    %80 = arith.select %78, %70, %79 : vector<2x8x128xi1>, vector<2x8x128xf32>
    %c0_29 = arith.constant 0 : index
    %c0_30 = arith.constant 0 : index
    %81 = vector.load %arg14[%c0_29, %c0_30] : memref<2x128xf32, #tpu.memory_space<vmem>>, vector<2x128xf32>
    %cst_31 = arith.constant dense<0.000000e+00> : vector<2x128xf32>
    %82 = vector.multi_reduction <add>, %80, %cst_31 [1] : vector<2x8x128xf32> to vector<2x128xf32>
    %83 = arith.addf %81, %82 : vector<2x128xf32>
    %c0_32 = arith.constant 0 : index
    %c0_33 = arith.constant 0 : index
    %84 = vector.load %arg14[%c0_32, %c0_33] : memref<2x128xf32, #tpu.memory_space<vmem>>, vector<2x128xf32>
    tpu.vector_store %arg14[%c0_32, %c0_33], %83 {strides = array<i32>} : memref<2x128xf32, #tpu.memory_space<vmem>>, vector<2x128xf32>,
    %c2_i32 = arith.constant 2 : i32
    %85 = arith.cmpi eq, %arg1, %c2_i32 : i32
    %86 = arith.extui %85 : i1 to i32
    %c0_i32_34 = arith.constant 0 : i32
    %87 = arith.cmpi ne, %86, %c0_i32_34 : i32
    scf.if %87 {
      %c0_35 = arith.constant 0 : index
      %c0_36 = arith.constant 0 : index
      %88 = vector.load %arg11[%c0_35, %c0_36] : memref<128x128xbf16, #tpu.memory_space<vmem>>, vector<128x128xbf16>
      %c0_37 = arith.constant 0 : index
      %c0_38 = arith.constant 0 : index
      %89 = vector.load %arg14[%c0_37, %c0_38] : memref<2x128xf32, #tpu.memory_space<vmem>>, vector<2x128xf32>
      %90 = arith.truncf %89 : vector<2x128xf32> to vector<2x128xbf16>
      %c0_39 = arith.constant 0 : index
      %c0_40 = arith.constant 0 : index
      %91 = vector.load %arg9[%c0_39, %c0_40] : memref<128x128xbf16, #tpu.memory_space<vmem>>, vector<128x128xbf16>
      %cst_41 = arith.constant dense<0.000000e+00> : vector<2x128xf32>
      %92 = tpu.matmul %90, %91, %cst_41 {dimension_numbers = #tpu.dot_dimension_numbers<[1], [0], [0], [1], [0, 0, 1, 1], [], []>} : vector<2x128xbf16>, vector<128x128xbf16>, vector<2x128xf32> -> vector<2x128xf32>
      %c0_42 = arith.constant 0 : index
      %c0_43 = arith.constant 0 : index
      %93 = vector.load %arg10[%c0_42, %c0_43] : memref<1x128xf32, #tpu.memory_space<vmem>>, vector<1x128xf32>
      %cst_44 = arith.constant 2.000000e+01 : f32
      %94 = vector.broadcast %cst_44 : f32 to vector<1x128xf32>
      %95 = arith.mulf %94, %93 : vector<1x128xf32>
      %96 = vector.broadcast %95 : vector<1x128xf32> to vector<2x128xf32>
      %97 = arith.addf %92, %96 : vector<2x128xf32>
      %98 = arith.truncf %97 : vector<2x128xf32> to vector<2x128xbf16>
      "tpu.trace_start"() <{level = 10 : i32, message = "bf,nf->bn"}> : () -> ()
      %cst_45 = arith.constant dense<0.000000e+00> : vector<2x128xf32>
      %99 = tpu.matmul %98, %88, %cst_45 {dimension_numbers = #tpu.dot_dimension_numbers<[1], [1], [0], [0], [0, 0, 1, 0], [], []>} : vector<2x128xbf16>, vector<128x128xbf16>, vector<2x128xf32> -> vector<2x128xf32>
      "tpu.trace_stop"() : () -> ()
      %cst_46 = arith.constant 0.0883883461 : f32
      %100 = vector.broadcast %cst_46 : f32 to vector<2x128xf32>
      %101 = arith.mulf %99, %100 : vector<2x128xf32>
      %cst_47 = arith.constant dense<0xFF800000> : vector<2xf32>
      %102 = vector.multi_reduction <maximumf>, %101, %cst_47 [1] : vector<2x128xf32> to vector<2xf32>
      %103 = vector.shape_cast %102 : vector<2xf32> to vector<2x1xf32>
      %104 = vector.broadcast %103 : vector<2x1xf32> to vector<2x128xf32>
      %105 = arith.subf %101, %104 : vector<2x128xf32>
      %106 = math.exp %105 : vector<2x128xf32>
      %cst_48 = arith.constant dense<0.000000e+00> : vector<2xf32>
      %107 = vector.multi_reduction <add>, %106, %cst_48 [1] : vector<2x128xf32> to vector<2xf32>
      %108 = vector.shape_cast %107 : vector<2xf32> to vector<2x1xf32>
      %109 = tpu.reciprocal %108 {approx = true} : vector<2x1xf32> -> vector<2x1xf32>
      %110 = vector.broadcast %109 : vector<2x1xf32> to vector<2x128xf32>
      %111 = arith.mulf %106, %110 : vector<2x128xf32>
      %112 = arith.truncf %111 : vector<2x128xf32> to vector<2x128xbf16>
      %cst_49 = arith.constant dense<0.000000e+00> : vector<2x128xf32>
      %113 = tpu.matmul %112, %88, %cst_49 {dimension_numbers = #tpu.dot_dimension_numbers<[1], [0], [0], [1], [0, 0, 1, 1], [], []>} : vector<2x128xbf16>, vector<128x128xbf16>, vector<2x128xf32> -> vector<2x128xf32>
      %114 = arith.mulf %113, %113 : vector<2x128xf32>
      %cst_50 = arith.constant dense<0.000000e+00> : vector<2xf32>
      %115 = vector.multi_reduction <add>, %114, %cst_50 [1] : vector<2x128xf32> to vector<2xf32>
      %116 = vector.shape_cast %115 : vector<2xf32> to vector<2x1xf32>
      %117 = math.sqrt %116 : vector<2x1xf32>
      %cst_51 = arith.constant 1.000000e-10 : f32
      %118 = vector.broadcast %cst_51 : f32 to vector<2x1xf32>
      %119 = arith.addf %117, %118 : vector<2x1xf32>
      %120 = tpu.reciprocal %119 {approx = true} : vector<2x1xf32> -> vector<2x1xf32>
      %121 = vector.broadcast %120 : vector<2x1xf32> to vector<2x128xf32>
      %122 = arith.mulf %113, %121 : vector<2x128xf32>
      %c0_52 = arith.constant 0 : index
      %c0_53 = arith.constant 0 : index
      %123 = vector.load %arg12[%c0_52, %c0_53] : memref<2x128xf32, #tpu.memory_space<vmem>>, vector<2x128xf32>
      tpu.vector_store %arg12[%c0_52, %c0_53], %111 {strides = array<i32>} : memref<2x128xf32, #tpu.memory_space<vmem>>, vector<2x128xf32>,
      %c0_54 = arith.constant 0 : index
      %c0_55 = arith.constant 0 : index
      %124 = vector.load %arg13[%c0_54, %c0_55] : memref<2x128xf32, #tpu.memory_space<vmem>>, vector<2x128xf32>
      tpu.vector_store %arg13[%c0_54, %c0_55], %122 {strides = array<i32>} : memref<2x128xf32, #tpu.memory_space<vmem>>, vector<2x128xf32>,
    } else {
    }
    return
  }
  func.func @transform_0(%arg0: i32, %arg1: i32) -> (i32, i32, i32) {
    %c0_i32 = arith.constant 0 : i32
    %c0_i32_0 = arith.constant 0 : i32
    return %arg0, %arg1, %c0_i32 : i32, i32, i32
  }
  func.func @transform_1(%arg0: i32, %arg1: i32) -> (i32, i32) {
    %c0_i32 = arith.constant 0 : i32
    %c0_i32_0 = arith.constant 0 : i32
    %c0_i32_1 = arith.constant 0 : i32
    return %c0_i32, %c0_i32_0 : i32, i32
  }
  func.func @transform_2(%arg0: i32, %arg1: i32) -> (i32, i32) {
    %c0_i32 = arith.constant 0 : i32
    %c0_i32_0 = arith.constant 0 : i32
    %c0_i32_1 = arith.constant 0 : i32
    return %c0_i32, %c0_i32_0 : i32, i32
  }
  func.func @transform_3(%arg0: i32, %arg1: i32) -> (i32, i32) {
    %c0_i32 = arith.constant 0 : i32
    %c0_i32_0 = arith.constant 0 : i32
    %c0_i32_1 = arith.constant 0 : i32
    return %c0_i32, %c0_i32_0 : i32, i32
  }
  func.func @transform_4(%arg0: i32, %arg1: i32) -> (i32, i32) {
    %c0_i32 = arith.constant 0 : i32
    %c0_i32_0 = arith.constant 0 : i32
    %c0_i32_1 = arith.constant 0 : i32
    return %c0_i32, %c0_i32_0 : i32, i32
  }
  func.func @transform_5(%arg0: i32, %arg1: i32) -> (i32, i32) {
    %c0_i32 = arith.constant 0 : i32
    %c0_i32_0 = arith.constant 0 : i32
    %c0_i32_1 = arith.constant 0 : i32
    return %c0_i32, %c0_i32_0 : i32, i32
  }
  func.func @transform_6(%arg0: i32, %arg1: i32) -> (i32, i32) {
    %c0_i32 = arith.constant 0 : i32
    %c0_i32_0 = arith.constant 0 : i32
    %c0_i32_1 = arith.constant 0 : i32
    return %c0_i32, %c0_i32_0 : i32, i32
  }
  func.func @transform_7(%arg0: i32, %arg1: i32) -> (i32, i32) {
    %c0_i32 = arith.constant 0 : i32
    %c0_i32_0 = arith.constant 0 : i32
    %c0_i32_1 = arith.constant 0 : i32
    return %c0_i32, %c0_i32_0 : i32, i32
  }
  func.func @transform_8(%arg0: i32, %arg1: i32) -> (i32, i32) {
    %c0_i32 = arith.constant 0 : i32
    %c0_i32_0 = arith.constant 0 : i32
    %c0_i32_1 = arith.constant 0 : i32
    return %c0_i32, %c0_i32_0 : i32, i32
  }
  func.func @transform_9(%arg0: i32, %arg1: i32) -> (i32, i32) {
    %c0_i32 = arith.constant 0 : i32
    %c0_i32_0 = arith.constant 0 : i32
    %c0_i32_1 = arith.constant 0 : i32
    return %c0_i32, %c0_i32_0 : i32, i32
  }
  func.func @transform_10(%arg0: i32, %arg1: i32) -> (i32, i32) {
    %c0_i32 = arith.constant 0 : i32
    %c0_i32_0 = arith.constant 0 : i32
    return %arg0, %c0_i32 : i32, i32
  }
  func.func @transform_11(%arg0: i32, %arg1: i32) -> (i32, i32) {
    %c0_i32 = arith.constant 0 : i32
    %c0_i32_0 = arith.constant 0 : i32
    return %arg0, %c0_i32 : i32, i32
  }
}

</mosaic_0001>

<llo_original>
// kernel: tpu_custom_call.1
$region0: #{tpu_custom_call.1}
  #allocation0 [shape = 'u32[]', space=smem, size = 0x4, offset = 0x4, fixed_abs, tag = 'smem constant byte address 0x4 - core index']
  #allocation1 [shape = 'u32[144,128]{1,0:T(1,128)}', space=vmem, size = 0x12000, scoped, tag = 'internal scratch']
  #allocation2 [shape = 'f32[2,128]{1,0:T(2,128)}', space=vmem, size = 0x400, scoped, tag = 'scratch operand']
  %s0 = inlined_call_operand.hbm [shape: f32[2,24,32], index: 0, kind: input, shape index: {}]
  %s1 = inlined_call_operand.vmem [shape: f32[1,32], index: 1, kind: input, shape index: {}]
  %s2 = inlined_call_operand.vmem [shape: f32[1,32], index: 2, kind: input, shape index: {}]
  %s3 = inlined_call_operand.hbm [shape: bf16[32,128], index: 3, kind: input, shape index: {}]
  %s4 = inlined_call_operand.vmem [shape: f32[1,128], index: 4, kind: input, shape index: {}]
  %s5 = inlined_call_operand.vmem [shape: f32[1,128], index: 5, kind: input, shape index: {}]
  %s6 = inlined_call_operand.vmem [shape: f32[1,128], index: 6, kind: input, shape index: {}]
  %s7 = inlined_call_operand.hbm [shape: bf16[128,128], index: 7, kind: input, shape index: {}]
  %s8 = inlined_call_operand.vmem [shape: f32[1,128], index: 8, kind: input, shape index: {}]
  %s9 = inlined_call_operand.hbm [shape: bf16[128,128], index: 9, kind: input, shape index: {}]
  %s10 = inlined_call_operand.hbm [shape: f32[2,128], index: 10, kind: output, shape index: {0}]
  %s11 = inlined_call_operand.hbm [shape: f32[2,128], index: 11, kind: output, shape index: {1}]
  %12 = xla_tuple %s10, %s11
  %s13 = sld [smem:[#allocation0]]
  $region105: #{tpu_custom_call.1} parent=0
    _
  %s15 = ssub.s32 1, %s13
  %s16 = scalar_select 0, %s15, %s13
  $region1: #{tpu_custom_call.1} parent=0
    #allocation3 [shape = 'u8[16384]{0}', space=vmem, size = 0x4000, scoped, tag = 'input window, operand 0']
    #allocation4 [shape = 's32[2]{0}', space=sflag, size = 0x8, scoped, tag = 'scoped memory for tpu_custom_call.1']
    #allocation5 [shape = 's32[2]{0}', space=sflag, size = 0x8, scoped, tag = 'scoped memory for tpu_custom_call.1']
    #allocation6 [shape = 'u8[8192]{0}', space=vmem, size = 0x2000, scoped, tag = 'input window, operand 3, single buffered']
    #allocation7 [shape = 's32[1]{0}', space=sflag, size = 0x4, scoped, tag = 'scoped memory for tpu_custom_call.1']
    #allocation8 [shape = 'u8[32768]{0}', space=vmem, size = 0x8000, scoped, tag = 'input window, operand 7, single buffered']
    #allocation9 [shape = 'u8[32768]{0}', space=vmem, size = 0x8000, scoped, tag = 'input window, operand 9, single buffered']
    #allocation10 [shape = 's32[1]{0}', space=sflag, size = 0x4, scoped, tag = 'scoped memory for tpu_custom_call.1']
    #allocation11 [shape = 'u8[1024]{0}', space=vmem, size = 0x400, scoped, tag = 'output window, operand 0, single buffered']
    #allocation12 [shape = 'u8[1024]{0}', space=vmem, size = 0x400, scoped, tag = 'output window, operand 1, single buffered']
    #allocation13 [shape = 's32[1]{0}', space=sflag, size = 0x4, scoped, tag = 'scoped memory for tpu_custom_call.1']
    %17 = vsyncpa [#allocation4], 0
    %s18 = scalar_lea.sflag [#allocation4], 1
    %19 = vsyncpa %s18, 0
    %20 = vsyncpa [#allocation7], 0
    %21 = vsyncpa [#allocation10], 0
    %22 = vsyncpa [#allocation5], 0
    %23 = vsyncpa [#allocation13], 0
    loop: start=0, step=1, limit=5
    $region2: #{tpu_custom_call.1} parent=1 // loop_pre_header
      _
    $region3: #{tpu_custom_call.1} parent=1 // loop_header
      %s25 = sphi 0, %s29
      %p26 = scmp.ge.s32.totalorder %s25, 5
      %s32 = sphi 0, %s44
      %s33 = sphi 0, %s40
      %s34 = sphi 0, %s32
      %s35 = sphi 0, %s33
      %s36 = sphi 0, %s34
      %s37 = sphi 0, %s35
      %s49 = sphi 0, %s51
      %s52 = sphi 0, %s49
      %s53 = sphi 0, %s52
      %s69 = sphi 0, %s53
      %s73 = sphi 0, %s73
      %s75 = sphi 0, %s73
      %s76 = sphi 0, %s75
      %s90 = sphi 0, %s76
      %s94 = sphi 0, %s94
      %s96 = sphi 0, %s94
      %s97 = sphi 0, %s96
      %s111 = sphi 0, %s97
      %s115 = sphi 0, %s115
      %s117 = sphi 0, %s115
      %s118 = sphi 0, %s117
      %s132 = sphi 0, %s118
      %s136 = sphi 0, %s136
      %s138 = sphi 0, %s136
      %s139 = sphi 0, %s138
      %s153 = sphi 0, %s139
      %s157 = sphi 0, %s157
      %s159 = sphi 0, %s157
      %s160 = sphi 0, %s159
      %s174 = sphi 0, %s160
      %s178 = sphi 0, %s178
      %s180 = sphi 0, %s178
      %s181 = sphi 0, %s180
      %s195 = sphi 0, %s181
      %s199 = sphi 0, %s199
      %s201 = sphi 0, %s199
      %s202 = sphi 0, %s201
      %s216 = sphi 0, %s202
      %s220 = sphi 0, %s220
      %s222 = sphi 0, %s220
      %s223 = sphi 0, %s222
      %s237 = sphi 0, %s223
      %s241 = sphi 0, %s241
      %s243 = sphi 0, %s241
      %s244 = sphi 0, %s243
      %s258 = sphi 0, %s244
      %s264 = sphi 0, %s266
      %s267 = sphi 0, %s264
      %s268 = sphi 0, %s267
      %s284 = sphi 0, %s268
      %s290 = sphi 0, %s292
      %s293 = sphi 0, %s290
      %s294 = sphi 0, %s293
      %s310 = sphi 0, %s294
    $region4: #{tpu_custom_call.1} parent=1 // loop_header_branch
      %28 = sbr.rel (%p26) target = $region8
    $region5: #{tpu_custom_call.1} parent=1 // loop_body
      %s30 = ssub.s32 %s25, 1
      %s31 = ssub.s32 %s25, 2
      %s38 = sadd.s32 1, %s33
      %p39 = scmp.ge.s32.totalorder %s38, 3
      %s40 = scalar_select %p39, 0, %s38
      %s41 = sadd.s32 1, %s32
      %s42 = scalar_select %p39, %s41, %s32
      %p43 = scmp.ge.s32.totalorder %s42, 1
      %s44 = scalar_select %p43, 0, %s42
      %s45 = ssub.s32 %s32, %s44
      %s46 = ssub.s32 %s33, %s40
      %s47 = sor.u32 %s45, %s46
      %p48 = scmp.eq.s32.totalorder %s47, 0
      %s50 = sadd.s32 %s49, 1
      %s51 = scalar_select %p48, %s49, %s50
      %p54 = pneg %p48
      %p55 = scmp.eq.s32.totalorder %s25, 2
      %p56 = por %p54, %p55
      %p57 = scmp.ne.s32.totalorder %s49, %s52
      %p58 = scmp.eq.s32.totalorder %s25, 0
      %p59 = por %p57, %p58
      %p60 = scmp.ne.s32.totalorder %s49, %s52
      %p61 = scmp.eq.s32.totalorder %s30, 2
      %p62 = por %p60, %p61
      %p63 = scmp.ne.s32.totalorder %s52, %s53
      %p64 = scmp.eq.s32.totalorder %s30, 0
      %p65 = por %p63, %p64
      %p66 = scmp.ne.s32.totalorder %s52, %s53
      %p67 = scmp.eq.s32.totalorder %s31, 2
      %p68 = por %p66, %p67
      %p70 = scmp.ne.s32.totalorder %s53, %s69
      %p71 = scmp.eq.s32.totalorder %s31, 0
      %p72 = por %p70, %p71
      %s74 = sadd.s32 %s73, 1
      %p77 = scmp.eq.s32.totalorder %s25, 2
      %p78 = scmp.ne.s32.totalorder %s73, %s75
      %p79 = scmp.eq.s32.totalorder %s25, 0
      %p80 = por %p78, %p79
      %p81 = scmp.ne.s32.totalorder %s73, %s75
      %p82 = scmp.eq.s32.totalorder %s30, 2
      %p83 = por %p81, %p82
      %p84 = scmp.ne.s32.totalorder %s75, %s76
      %p85 = scmp.eq.s32.totalorder %s30, 0
      %p86 = por %p84, %p85
      %p87 = scmp.ne.s32.totalorder %s75, %s76
      %p88 = scmp.eq.s32.totalorder %s31, 2
      %p89 = por %p87, %p88
      %p91 = scmp.ne.s32.totalorder %s76, %s90
      %p92 = scmp.eq.s32.totalorder %s31, 0
      %p93 = por %p91, %p92
      %s95 = sadd.s32 %s94, 1
      %p98 = scmp.eq.s32.totalorder %s25, 2
      %p99 = scmp.ne.s32.totalorder %s94, %s96
      %p100 = scmp.eq.s32.totalorder %s25, 0
      %p101 = por %p99, %p100
      %p102 = scmp.ne.s32.totalorder %s94, %s96
      %p103 = scmp.eq.s32.totalorder %s30, 2
      %p104 = por %p102, %p103
      %p105 = scmp.ne.s32.totalorder %s96, %s97
      %p106 = scmp.eq.s32.totalorder %s30, 0
      %p107 = por %p105, %p106
      %p108 = scmp.ne.s32.totalorder %s96, %s97
      %p109 = scmp.eq.s32.totalorder %s31, 2
      %p110 = por %p108, %p109
      %p112 = scmp.ne.s32.totalorder %s97, %s111
      %p113 = scmp.eq.s32.totalorder %s31, 0
      %p114 = por %p112, %p113
      %s116 = sadd.s32 %s115, 1
      %p119 = scmp.eq.s32.totalorder %s25, 2
      %p120 = scmp.ne.s32.totalorder %s115, %s117
      %p121 = scmp.eq.s32.totalorder %s25, 0
      %p122 = por %p120, %p121
      %p123 = scmp.ne.s32.totalorder %s115, %s117
      %p124 = scmp.eq.s32.totalorder %s30, 2
      %p125 = por %p123, %p124
      %p126 = scmp.ne.s32.totalorder %s117, %s118
      %p127 = scmp.eq.s32.totalorder %s30, 0
      %p128 = por %p126, %p127
      %p129 = scmp.ne.s32.totalorder %s117, %s118
      %p130 = scmp.eq.s32.totalorder %s31, 2
      %p131 = por %p129, %p130
      %p133 = scmp.ne.s32.totalorder %s118, %s132
      %p134 = scmp.eq.s32.totalorder %s31, 0
      %p135 = por %p133, %p134
      %s137 = sadd.s32 %s136, 1
      %p140 = scmp.eq.s32.totalorder %s25, 2
      %p141 = scmp.ne.s32.totalorder %s136, %s138
      %p142 = scmp.eq.s32.totalorder %s25, 0
      %p143 = por %p141, %p142
      %p144 = scmp.ne.s32.totalorder %s136, %s138
      %p145 = scmp.eq.s32.totalorder %s30, 2
      %p146 = por %p144, %p145
      %p147 = scmp.ne.s32.totalorder %s138, %s139
      %p148 = scmp.eq.s32.totalorder %s30, 0
      %p149 = por %p147, %p148
      %p150 = scmp.ne.s32.totalorder %s138, %s139
      %p151 = scmp.eq.s32.totalorder %s31, 2
      %p152 = por %p150, %p151
      %p154 = scmp.ne.s32.totalorder %s139, %s153
      %p155 = scmp.eq.s32.totalorder %s31, 0
      %p156 = por %p154, %p155
      %s158 = sadd.s32 %s157, 1
      %p161 = scmp.eq.s32.totalorder %s25, 2
      %p162 = scmp.ne.s32.totalorder %s157, %s159
      %p163 = scmp.eq.s32.totalorder %s25, 0
      %p164 = por %p162, %p163
      %p165 = scmp.ne.s32.totalorder %s157, %s159
      %p166 = scmp.eq.s32.totalorder %s30, 2
      %p167 = por %p165, %p166
      %p168 = scmp.ne.s32.totalorder %s159, %s160
      %p169 = scmp.eq.s32.totalorder %s30, 0
      %p170 = por %p168, %p169
      %p171 = scmp.ne.s32.totalorder %s159, %s160
      %p172 = scmp.eq.s32.totalorder %s31, 2
      %p173 = por %p171, %p172
      %p175 = scmp.ne.s32.totalorder %s160, %s174
      %p176 = scmp.eq.s32.totalorder %s31, 0
      %p177 = por %p175, %p176
      %s179 = sadd.s32 %s178, 1
      %p182 = scmp.eq.s32.totalorder %s25, 2
      %p183 = scmp.ne.s32.totalorder %s178, %s180
      %p184 = scmp.eq.s32.totalorder %s25, 0
      %p185 = por %p183, %p184
      %p186 = scmp.ne.s32.totalorder %s178, %s180
      %p187 = scmp.eq.s32.totalorder %s30, 2
      %p188 = por %p186, %p187
      %p189 = scmp.ne.s32.totalorder %s180, %s181
      %p190 = scmp.eq.s32.totalorder %s30, 0
      %p191 = por %p189, %p190
      %p192 = scmp.ne.s32.totalorder %s180, %s181
      %p193 = scmp.eq.s32.totalorder %s31, 2
      %p194 = por %p192, %p193
      %p196 = scmp.ne.s32.totalorder %s181, %s195
      %p197 = scmp.eq.s32.totalorder %s31, 0
      %p198 = por %p196, %p197
      %s200 = sadd.s32 %s199, 1
      %p203 = scmp.eq.s32.totalorder %s25, 2
      %p204 = scmp.ne.s32.totalorder %s199, %s201
      %p205 = scmp.eq.s32.totalorder %s25, 0
      %p206 = por %p204, %p205
      %p207 = scmp.ne.s32.totalorder %s199, %s201
      %p208 = scmp.eq.s32.totalorder %s30, 2
      %p209 = por %p207, %p208
      %p210 = scmp.ne.s32.totalorder %s201, %s202
      %p211 = scmp.eq.s32.totalorder %s30, 0
      %p212 = por %p210, %p211
      %p213 = scmp.ne.s32.totalorder %s201, %s202
      %p214 = scmp.eq.s32.totalorder %s31, 2
      %p215 = por %p213, %p214
      %p217 = scmp.ne.s32.totalorder %s202, %s216
      %p218 = scmp.eq.s32.totalorder %s31, 0
      %p219 = por %p217, %p218
      %s221 = sadd.s32 %s220, 1
      %p224 = scmp.eq.s32.totalorder %s25, 2
      %p225 = scmp.ne.s32.totalorder %s220, %s222
      %p226 = scmp.eq.s32.totalorder %s25, 0
      %p227 = por %p225, %p226
      %p228 = scmp.ne.s32.totalorder %s220, %s222
      %p229 = scmp.eq.s32.totalorder %s30, 2
      %p230 = por %p228, %p229
      %p231 = scmp.ne.s32.totalorder %s222, %s223
      %p232 = scmp.eq.s32.totalorder %s30, 0
      %p233 = por %p231, %p232
      %p234 = scmp.ne.s32.totalorder %s222, %s223
      %p235 = scmp.eq.s32.totalorder %s31, 2
      %p236 = por %p234, %p235
      %p238 = scmp.ne.s32.totalorder %s223, %s237
      %p239 = scmp.eq.s32.totalorder %s31, 0
      %p240 = por %p238, %p239
      %s242 = sadd.s32 %s241, 1
      %p245 = scmp.eq.s32.totalorder %s25, 2
      %p246 = scmp.ne.s32.totalorder %s241, %s243
      %p247 = scmp.eq.s32.totalorder %s25, 0
      %p248 = por %p246, %p247
      %p249 = scmp.ne.s32.totalorder %s241, %s243
      %p250 = scmp.eq.s32.totalorder %s30, 2
      %p251 = por %p249, %p250
      %p252 = scmp.ne.s32.totalorder %s243, %s244
      %p253 = scmp.eq.s32.totalorder %s30, 0
      %p254 = por %p252, %p253
      %p255 = scmp.ne.s32.totalorder %s243, %s244
      %p256 = scmp.eq.s32.totalorder %s31, 2
      %p257 = por %p255, %p256
      %p259 = scmp.ne.s32.totalorder %s244, %s258
      %p260 = scmp.eq.s32.totalorder %s31, 0
      %p261 = por %p259, %p260
      %s262 = ssub.s32 %s32, %s44
      %p263 = scmp.eq.s32.totalorder %s262, 0
      %s265 = sadd.s32 %s264, 1
      %s266 = scalar_select %p263, %s264, %s265
      %p269 = pneg %p263
      %p270 = scmp.eq.s32.totalorder %s25, 2
      %p271 = por %p269, %p270
      %p272 = scmp.ne.s32.totalorder %s264, %s267
      %p273 = scmp.eq.s32.totalorder %s25, 0
      %p274 = por %p272, %p273
      %p275 = scmp.ne.s32.totalorder %s264, %s267
      %p276 = scmp.eq.s32.totalorder %s30, 2
      %p277 = por %p275, %p276
      %p278 = scmp.ne.s32.totalorder %s267, %s268
      %p279 = scmp.eq.s32.totalorder %s30, 0
      %p280 = por %p278, %p279
      %p281 = scmp.ne.s32.totalorder %s267, %s268
      %p282 = scmp.eq.s32.totalorder %s31, 2
      %p283 = por %p281, %p282
      %p285 = scmp.ne.s32.totalorder %s268, %s284
      %p286 = scmp.eq.s32.totalorder %s31, 0
      %p287 = por %p285, %p286
      %s288 = ssub.s32 %s32, %s44
      %p289 = scmp.eq.s32.totalorder %s288, 0
      %s291 = sadd.s32 %s290, 1
      %s292 = scalar_select %p289, %s290, %s291
      %p295 = pneg %p289
      %p296 = scmp.eq.s32.totalorder %s25, 2
      %p297 = por %p295, %p296
      %p298 = scmp.ne.s32.totalorder %s290, %s293
      %p299 = scmp.eq.s32.totalorder %s25, 0
      %p300 = por %p298, %p299
      %p301 = scmp.ne.s32.totalorder %s290, %s293
      %p302 = scmp.eq.s32.totalorder %s30, 2
      %p303 = por %p301, %p302
      %p304 = scmp.ne.s32.totalorder %s293, %s294
      %p305 = scmp.eq.s32.totalorder %s30, 0
      %p306 = por %p304, %p305
      %p307 = scmp.ne.s32.totalorder %s293, %s294
      %p308 = scmp.eq.s32.totalorder %s31, 2
      %p309 = por %p307, %p308
      %p311 = scmp.ne.s32.totalorder %s294, %s310
      %p312 = scmp.eq.s32.totalorder %s31, 0
      %p313 = por %p311, %p312
      %p314 = scmp.le.s32.totalorder 1, %s25
      %p315 = scmp.lt.s32.totalorder %s25, 4
      %p316 = pnand %p314, %p315
      %p317 = pneg %p316
      // Predicated region
      $region9: #{tpu_custom_call.1} parent=5 // pred_check
        _
      $region10: #{tpu_custom_call.1} parent=5 // pred_check_branch
        %319 = sbr.rel (%p316) target = $region12
      $region11: #{tpu_custom_call.1} parent=5 // pred_region
        %s320 = ssub.s32 %s25, 1
        // Predicated region
        $region13: #{tpu_custom_call.1} parent=11 // pred_check
          %p321 = pneg %p86
        $region14: #{tpu_custom_call.1} parent=11 // pred_check_branch
          %323 = sbr.rel (%p321) target = $region16
        $region15: #{tpu_custom_call.1} parent=11 // pred_region
          _
        $region16: #{tpu_custom_call.1} parent=11 // pred_fallthru
          _
        // Predicated region
        $region17: #{tpu_custom_call.1} parent=11 // pred_check
          %p324 = pneg %p107
        $region18: #{tpu_custom_call.1} parent=11 // pred_check_branch
          %326 = sbr.rel (%p324) target = $region20
        $region19: #{tpu_custom_call.1} parent=11 // pred_region
          _
        $region20: #{tpu_custom_call.1} parent=11 // pred_fallthru
          _
        // Predicated region
        $region21: #{tpu_custom_call.1} parent=11 // pred_check
          %p327 = pneg %p128
        $region22: #{tpu_custom_call.1} parent=11 // pred_check_branch
          %329 = sbr.rel (%p327) target = $region24
        $region23: #{tpu_custom_call.1} parent=11 // pred_region
          %s331 = ssub.s32 256, 256
          %332 = vsyncadd [#allocation7], %s331
          %s333 = sshll.u32 [#allocation6], 4
          %s334 = int_to_ptr.vmem [resolvable:$true] %s333
          %339 = dma.hbm_to_vmem [thread:$0]  %s3, 256, %s334, [#allocation7], 64, 64, 4
        $region24: #{tpu_custom_call.1} parent=11 // pred_fallthru
          _
        // Predicated region
        $region25: #{tpu_custom_call.1} parent=11 // pred_check
          %p340 = pneg %p149
        $region26: #{tpu_custom_call.1} parent=11 // pred_check_branch
          %342 = sbr.rel (%p340) target = $region28
        $region27: #{tpu_custom_call.1} parent=11 // pred_region
          _
        $region28: #{tpu_custom_call.1} parent=11 // pred_fallthru
          _
        // Predicated region
        $region29: #{tpu_custom_call.1} parent=11 // pred_check
          %p343 = pneg %p170
        $region30: #{tpu_custom_call.1} parent=11 // pred_check_branch
          %345 = sbr.rel (%p343) target = $region32
        $region31: #{tpu_custom_call.1} parent=11 // pred_region
          _
        $region32: #{tpu_custom_call.1} parent=11 // pred_fallthru
          _
        // Predicated region
        $region33: #{tpu_custom_call.1} parent=11 // pred_check
          %p346 = pneg %p191
        $region34: #{tpu_custom_call.1} parent=11 // pred_check_branch
          %348 = sbr.rel (%p346) target = $region36
        $region35: #{tpu_custom_call.1} parent=11 // pred_region
          _
        $region36: #{tpu_custom_call.1} parent=11 // pred_fallthru
          _
        // Predicated region
        $region37: #{tpu_custom_call.1} parent=11 // pred_check
          %p349 = pneg %p212
        $region38: #{tpu_custom_call.1} parent=11 // pred_check_branch
          %351 = sbr.rel (%p349) target = $region40
        $region39: #{tpu_custom_call.1} parent=11 // pred_region
          %s353 = ssub.s32 1024, 1024
          %354 = vsyncadd [#allocation7], %s353
          %s355 = sshll.u32 [#allocation8], 4
          %s356 = int_to_ptr.vmem [resolvable:$true] %s355
          %361 = dma.hbm_to_vmem [thread:$0]  %s7, 1024, %s356, [#allocation7], 64, 64, 4
        $region40: #{tpu_custom_call.1} parent=11 // pred_fallthru
          _
        // Predicated region
        $region41: #{tpu_custom_call.1} parent=11 // pred_check
          %p362 = pneg %p233
        $region42: #{tpu_custom_call.1} parent=11 // pred_check_branch
          %364 = sbr.rel (%p362) target = $region44
        $region43: #{tpu_custom_call.1} parent=11 // pred_region
          _
        $region44: #{tpu_custom_call.1} parent=11 // pred_fallthru
          _
        // Predicated region
        $region45: #{tpu_custom_call.1} parent=11 // pred_check
          %p365 = pneg %p254
        $region46: #{tpu_custom_call.1} parent=11 // pred_check_branch
          %367 = sbr.rel (%p365) target = $region48
        $region47: #{tpu_custom_call.1} parent=11 // pred_region
          %s369 = ssub.s32 1024, 1024
          %370 = vsyncadd [#allocation10], %s369
          %s371 = sshll.u32 [#allocation9], 4
          %s372 = int_to_ptr.vmem [resolvable:$true] %s371
          %377 = dma.hbm_to_vmem [thread:$0]  %s9, 1024, %s372, [#allocation10], 64, 64, 4
        $region48: #{tpu_custom_call.1} parent=11 // pred_fallthru
          _
      $region12: #{tpu_custom_call.1} parent=5 // pred_fallthru
        _
      %p378 = scmp.lt.s32.totalorder %s25, 3
      // Predicated region
      $region49: #{tpu_custom_call.1} parent=5 // pred_check
        %p379 = pneg %p378
      $region50: #{tpu_custom_call.1} parent=5 // pred_check_branch
        %381 = sbr.rel (%p379) target = $region52
      $region51: #{tpu_custom_call.1} parent=5 // pred_region
        // Predicated region
        $region53: #{tpu_custom_call.1} parent=51 // pred_check
          %p382 = pneg %p59
        $region54: #{tpu_custom_call.1} parent=51 // pred_check_branch
          %384 = sbr.rel (%p382) target = $region56
        $region55: #{tpu_custom_call.1} parent=51 // pred_region
          %s385 = sand.u32 %s49, 1
          %s386 = scalar_lea.sflag [#allocation4], %s385
          %s387 = sand.u32 %s49, 1
          %s388 = smul.addr %s387, 16
          %s389 = scalar_lea.vmem [#allocation3], %s388
          %s390 = smul.u32 2, %s32
          %s392 = ssub.s32 256, 256
          %393 = vsyncadd %s386, %s392
          %s394 = smul.addr %s390, 3
          %s395 = sadd.s32 %s33, %s394
          %s396 = smul.addr %s395, 128
          %s397 = scalar_lea.hbm %s0, %s396
          %s398 = sshll.u32 %s389, 4
          %s399 = int_to_ptr.vmem [resolvable:$true] %s398
          %404 = dma.hbm_to_vmem [thread:$0]  %s397, 256, %s399, %s386, 384, 128, 8
        $region56: #{tpu_custom_call.1} parent=51 // pred_fallthru
          _
      $region52: #{tpu_custom_call.1} parent=5 // pred_fallthru
        _
      %p405 = scmp.le.s32.totalorder 1, %s25
      %p406 = scmp.lt.s32.totalorder %s25, 4
      %p407 = pnand %p405, %p406
      %p408 = pneg %p407
      // Predicated region
      $region57: #{tpu_custom_call.1} parent=5 // pred_check
        _
      $region58: #{tpu_custom_call.1} parent=5 // pred_check_branch
        %410 = sbr.rel (%p407) target = $region60
      $region59: #{tpu_custom_call.1} parent=5 // pred_region
        %s411 = ssub.s32 %s25, 1
        %s412 = sand.u32 %s52, 1
        %s413 = scalar_lea.sflag [#allocation4], %s412
        %s414 = sand.u32 %s52, 1
        %s415 = smul.addr %s414, 16
        %s416 = scalar_lea.vmem [#allocation3], %s415
        // Predicated region
        $region61: #{tpu_custom_call.1} parent=59 // pred_check
          %p417 = pneg %p65
        $region62: #{tpu_custom_call.1} parent=59 // pred_check_branch
          %419 = sbr.rel (%p417) target = $region64
        $region63: #{tpu_custom_call.1} parent=59 // pred_region
          %420 = dma.done %s413, 256
        $region64: #{tpu_custom_call.1} parent=59 // pred_fallthru
          _
        // Predicated region
        $region65: #{tpu_custom_call.1} parent=59 // pred_check
          %p421 = pneg %p128
        $region66: #{tpu_custom_call.1} parent=59 // pred_check_branch
          %423 = sbr.rel (%p421) target = $region68
        $region67: #{tpu_custom_call.1} parent=59 // pred_region
          %424 = dma.done [#allocation7], 256
        $region68: #{tpu_custom_call.1} parent=59 // pred_fallthru
          _
        // Predicated region
        $region69: #{tpu_custom_call.1} parent=59 // pred_check
          %p425 = pneg %p212
        $region70: #{tpu_custom_call.1} parent=59 // pred_check_branch
          %427 = sbr.rel (%p425) target = $region72
        $region71: #{tpu_custom_call.1} parent=59 // pred_region
          %428 = dma.done [#allocation7], 1024
        $region72: #{tpu_custom_call.1} parent=59 // pred_fallthru
          _
        // Predicated region
        $region73: #{tpu_custom_call.1} parent=59 // pred_check
          %p429 = pneg %p254
        $region74: #{tpu_custom_call.1} parent=59 // pred_check_branch
          %431 = sbr.rel (%p429) target = $region76
        $region75: #{tpu_custom_call.1} parent=59 // pred_region
          %432 = dma.done [#allocation10], 1024
        $region76: #{tpu_custom_call.1} parent=59 // pred_fallthru
          _
        %s433 = sand.u32 %s52, 1
        %s434 = scalar_lea.sflag [#allocation4], %s433
        %s435 = sand.u32 %s52, 1
        %s436 = smul.addr %s435, 16
        %s437 = scalar_lea.vmem [#allocation3], %s436
        %p438 = pneg %p65
        %p439 = pneg %p62
        %p440 = pneg %p86
        %p441 = pneg %p83
        %p442 = pneg %p107
        %p443 = pneg %p104
        %p444 = pneg %p128
        %p445 = pneg %p125
        %p446 = pneg %p149
        %p447 = pneg %p146
        %p448 = pneg %p170
        %p449 = pneg %p167
        %p450 = pneg %p191
        %p451 = pneg %p188
        %p452 = pneg %p212
        %p453 = pneg %p209
        %p454 = pneg %p233
        %p455 = pneg %p230
        %p456 = pneg %p254
        %p457 = pneg %p251
        %p458 = pneg %p280
        %p459 = pneg %p277
        %p460 = pneg %p306
        %p461 = pneg %p303
        %s462 = smul.u32 2, %s34
        %p464 = scmp.eq.s32.totalorder %s35, 0
        // Predicated region
        $region77: #{tpu_custom_call.1} parent=59 // pred_check
          %p465 = pneg %p464
        $region78: #{tpu_custom_call.1} parent=59 // pred_check_branch
          %467 = sbr.rel (%p465) target = $region80
        $region79: #{tpu_custom_call.1} parent=59 // pred_region
          %468 = vst [vmem:[#allocation2] sm:$0x3] 0.0
        $region80: #{tpu_custom_call.1} parent=59 // pred_fallthru
          _
        %v469 = vld [vmem:[%s416] sm:$0xff]
        %v470 = vld [vmem:[%s416 + $0x8] sm:$0xff]
        %vm471 = vcmask 261120
        %v472 = vsel %vm471, %v469, 0.0
        %473 = vadd.xlane.f32.xlu0 %v472
        %v474 = vpop.xlane.xlu0 %473
        %v475 = vsel %vm471, %v470, 0.0
        %476 = vadd.xlane.f32.xlu0 %v475
        %v477 = vpop.xlane.xlu0 %476
        %v478 = vrcp.pop 32.0
        %v479 = vmul.f32 %v474, %v478
        %v480 = vmul.f32 %v477, %v478
        %v481 = vsub.f32 %v469, %v479
        %v482 = vsub.f32 %v470, %v480
        %v483 = vmul.f32 %v481, %v481
        %v484 = vmul.f32 %v482, %v482
        %v485 = vsel %vm471, %v483, 0.0
        %486 = vadd.xlane.f32.xlu0 %v485
        %v487 = vpop.xlane.xlu0 %486
        %v488 = vsel %vm471, %v484, 0.0
        %489 = vadd.xlane.f32.xlu0 %v488
        %v490 = vpop.xlane.xlu0 %489
        %v491 = vmul.f32 %v487, %v478
        %v492 = vmul.f32 %v490, %v478
        %v493 = vadd.f32 %v491, 1e-05
        %v494 = vadd.f32 %v492, 1e-05
        %v495 = vrsqrt.pop %v493
        %v496 = vrsqrt.pop %v494
        %v497 = vmul.f32 %v481, %v495
        %v498 = vmul.f32 %v482, %v496
        %v499 = vld [vmem:[%s1] sm:$0x1]
        %v501 = vlaneseq
        %v502 = vshrl.u32 %v501, 7
        %v503 = vsub.s32 0, %v502
        %v504 = vrot.slane %v499, %v503
        %v506 = vmul.f32 %v497, %v504
        %v507 = vmul.f32 %v498, %v504
        %v508 = vld [vmem:[%s2] sm:$0x1]
        %v510 = vlaneseq
        %v511 = vshrl.u32 %v510, 7
        %v512 = vsub.s32 0, %v511
        %v513 = vrot.slane %v508, %v512
        %v515 = vadd.f32 %v506, %v513
        %v516 = vadd.f32 %v507, %v513
        %v517 = vpack.c.bf16 %v515, %v515
        %v518 = vpack.c.bf16 %v516, %v516
        %v519 = vld [vmem:[#allocation6] sm:$0xf]
        %v520 = vld [vmem:[#allocation6 + $0x4] sm:$0xf]
        %v521 = vld [vmem:[#allocation6 + $0x8] sm:$0xf]
        %v522 = vld [vmem:[#allocation6 + $0xc] sm:$0xf]
        %v523 = vld [vmem:[%s4] sm:$0x1]
        %v525 = vlaneseq
        %v526 = vshrl.u32 %v525, 7
        %v527 = vsub.s32 0, %v526
        %v528 = vrot.slane %v523, %v527
        %v532 = vunpack.c.l.b16 %v517
        %v533 = vunpack.c.l.b16 %v518
        %v534 = vpack.c.b16 %v533, %v532
        %v539 = vunpack.c.l.b16 %v519
        %v540 = vunpack.c.l.b16 %v520
        %v541 = vunpack.c.l.b16 %v521
        %v542 = vunpack.c.l.b16 %v522
        %v543 = vpack.c.b16 %v540, %v539
        %v544 = vpack.c.b16 %v542, %v541
        %v548 = vsel %vm471, %v534, 0
        %550 = vmatprep.subr.bf16.mxu0 0
        %551 = vmatpush1.bf16.msra.mxu0 %v543
        %552 = vmatprep.subr.bf16.mxu0 0
        %553 = vmatpush1.bf16.msra.mxu0 %v544
        %554 = vmatprep.subr.bf16.mxu0 0
        %555 = vmatpush1.bf16.msra.mxu0 0
        %556 = vmatprep.subr.bf16.mxu0 0
        %557 = vmatpush1.bf16.msra.mxu0 0
        %558 = vmatprep.subr.bf16.mxu0 0
        %559 = vmatpush1.bf16.msra.mxu0 0
        %560 = vmatprep.subr.bf16.mxu0 0
        %561 = vmatpush1.bf16.msra.mxu0 0
        %562 = vmatprep.subr.bf16.mxu0 0
        %563 = vmatpush1.bf16.msra.mxu0 0
        %564 = vmatprep.subr.bf16.mxu0 0
        %565 = vmatpush1.bf16.msra.mxu0 0
        %566 = vmatprep.subr.bf16.mxu0 0
        %567 = vmatpush1.bf16.msra.mxu0 0
        %568 = vmatprep.subr.bf16.mxu0 0
        %569 = vmatpush1.bf16.msra.mxu0 0
        %570 = vmatprep.subr.bf16.mxu0 0
        %571 = vmatpush1.bf16.msra.mxu0 0
        %572 = vmatprep.subr.bf16.mxu0 0
        %573 = vmatpush1.bf16.msra.mxu0 0
        %574 = vmatprep.subr.bf16.mxu0 0
        %575 = vmatpush1.bf16.msra.mxu0 0
        %576 = vmatprep.subr.bf16.mxu0 0
        %577 = vmatpush1.bf16.msra.mxu0 0
        %578 = vmatprep.subr.bf16.mxu0 0
        %579 = vmatpush1.bf16.msra.mxu0 0
        %580 = vmatprep.subr.bf16.mxu0 0
        %581 = vmatpush1.bf16.msra.mxu0 0
        %582 = vmatprep.mubr.bf16.mxu0 0
        %583 = vmatmul.mubr.bf16.gmra.mrb[0].mxu0 %v548
        %v584 = vpop.f32.mrb[0].mxu0
        %v585 = vadd.f32 %v528, %v584
        %v586 = vpop.f32.mrb[0].mxu0
        %v587 = vpop.f32.mrb[0].mxu0
        %v588 = vadd.f32 %v528, %v587
        %v589 = vpop.f32.mrb[0].mxu0
        %590 = vdwg.mxu0
        %v591 = vmul.f32 %v585, 0.5
        %v592 = vmul.f32 %v588, 0.5
        %v593 = vmul.f32 %v585, 0.70710677
        %v594 = vmul.f32 %v588, 0.70710677
        %v595 = verf.f32.pop %v593
        %v596 = verf.f32.pop %v594
        %v597 = vadd.f32 %v595, 1.0
        %v598 = vadd.f32 %v596, 1.0
        %v599 = vmul.f32 %v591, %v597
        %v600 = vmul.f32 %v592, %v598
        %601 = vadd.xlane.f32.xlu0 %v599
        %v602 = vpop.xlane.xlu0 %601
        %603 = vadd.xlane.f32.xlu0 %v600
        %v604 = vpop.xlane.xlu0 %603
        %v605 = vrcp.pop 128.0
        %v606 = vmul.f32 %v602, %v605
        %v607 = vmul.f32 %v604, %v605
        %v608 = vsub.f32 %v599, %v606
        %v609 = vsub.f32 %v600, %v607
        %v610 = vmul.f32 %v608, %v608
        %v611 = vmul.f32 %v609, %v609
        %612 = vadd.xlane.f32.xlu0 %v610
        %v613 = vpop.xlane.xlu0 %612
        %614 = vadd.xlane.f32.xlu0 %v611
        %v615 = vpop.xlane.xlu0 %614
        %v616 = vmul.f32 %v613, %v605
        %v617 = vmul.f32 %v615, %v605
        %v618 = vadd.f32 %v616, 1e-05
        %v619 = vadd.f32 %v617, 1e-05
        %v620 = vrsqrt.pop %v618
        %v621 = vrsqrt.pop %v619
        %v622 = vmul.f32 %v608, %v620
        %v623 = vmul.f32 %v609, %v621
        %v624 = vld [vmem:[%s5] sm:$0x1]
        %v626 = vlaneseq
        %v627 = vshrl.u32 %v626, 7
        %v628 = vsub.s32 0, %v627
        %v629 = vrot.slane %v624, %v628
        %v631 = vmul.f32 %v622, %v629
        %v632 = vmul.f32 %v623, %v629
        %v633 = vld [vmem:[%s6] sm:$0x1]
        %v635 = vlaneseq
        %v636 = vshrl.u32 %v635, 7
        %v637 = vsub.s32 0, %v636
        %v638 = vrot.slane %v633, %v637
        %v640 = vadd.f32 %v631, %v638
        %v641 = vadd.f32 %v632, %v638
        %v642 = vlaneseq
        %v643 = vshrl.u32 %v642, 7
        %s644 = smul.u32 %s35, 8
        %v645 = vstv %s644
        %v646 = vadd.s32 %v643, %v645
        %vm647 = vcmp.lt.s32.totalorder %v646, 20
        %v648 = vsel %vm647, 1, 0
        %vm649 = vcmp.eq.s32.totalorder %v648, 1
        %v650 = vsel %vm649, %v640, 0.0
        %v651 = vsel %vm649, %v641, 0.0
        %v652 = vld [vmem:[#allocation2] sm:$0x3]
        %v653 = vrot.slane %v650, 4
        %v654 = vadd.f32 %v650, %v653
        %v655 = vrot.slane %v654, 2
        %v656 = vadd.f32 %v654, %v655
        %v657 = vrot.slane %v656, 1
        %v658 = vadd.f32 %v656, %v657
        %v659 = vrot.slane %v651, 4
        %v660 = vadd.f32 %v651, %v659
        %v661 = vrot.slane %v660, 2
        %v662 = vadd.f32 %v660, %v661
        %v663 = vrot.slane %v662, 1
        %v664 = vadd.f32 %v662, %v663
        %vm667 = vcmask 1041409
        %v668 = vsel %vm667, %v664, %v658
        %v670 = vadd.f32 %v652, %v668
        %671 = vst [vmem:[#allocation2] sm:$0x3] %v670
        %p672 = scmp.eq.s32.totalorder %s35, 2
        // Predicated region
        $region81: #{tpu_custom_call.1} parent=59 // pred_check
          %p673 = pneg %p672
        $region82: #{tpu_custom_call.1} parent=59 // pred_check_branch
          %675 = sbr.rel (%p673) target = $region84
        $region83: #{tpu_custom_call.1} parent=59 // pred_region
          %v676 = vld [vmem:[#allocation9] sm:$0xf]
          %v677 = vld [vmem:[#allocation9 + $0x4] sm:$0xf]
          %v678 = vld [vmem:[#allocation9 + $0x8] sm:$0xf]
          %v679 = vld [vmem:[#allocation9 + $0xc] sm:$0xf]
          %v680 = vld [vmem:[#allocation9 + $0x10] sm:$0xf]
          %v681 = vld [vmem:[#allocation9 + $0x14] sm:$0xf]
          %v682 = vld [vmem:[#allocation9 + $0x18] sm:$0xf]
          %v683 = vld [vmem:[#allocation9 + $0x1c] sm:$0xf]
          %v684 = vld [vmem:[#allocation9 + $0x20] sm:$0xf]
          %v685 = vld [vmem:[#allocation9 + $0x24] sm:$0xf]
          %v686 = vld [vmem:[#allocation9 + $0x28] sm:$0xf]
          %v687 = vld [vmem:[#allocation9 + $0x2c] sm:$0xf]
          %v688 = vld [vmem:[#allocation9 + $0x30] sm:$0xf]
          %v689 = vld [vmem:[#allocation9 + $0x34] sm:$0xf]
          %v690 = vld [vmem:[#allocation9 + $0x38] sm:$0xf]
          %v691 = vld [vmem:[#allocation9 + $0x3c] sm:$0xf]
          %v692 = vld [vmem:[#allocation2] sm:$0x3]
          %v693 = vpack.c.bf16 %v692, %v692
          %v694 = vld [vmem:[#allocation8] sm:$0xf]
          %v695 = vld [vmem:[#allocation8 + $0x4] sm:$0xf]
          %v696 = vld [vmem:[#allocation8 + $0x8] sm:$0xf]
          %v697 = vld [vmem:[#allocation8 + $0xc] sm:$0xf]
          %v698 = vld [vmem:[#allocation8 + $0x10] sm:$0xf]
          %v699 = vld [vmem:[#allocation8 + $0x14] sm:$0xf]
          %v700 = vld [vmem:[#allocation8 + $0x18] sm:$0xf]
          %v701 = vld [vmem:[#allocation8 + $0x1c] sm:$0xf]
          %v702 = vld [vmem:[#allocation8 + $0x20] sm:$0xf]
          %v703 = vld [vmem:[#allocation8 + $0x24] sm:$0xf]
          %v704 = vld [vmem:[#allocation8 + $0x28] sm:$0xf]
          %v705 = vld [vmem:[#allocation8 + $0x2c] sm:$0xf]
          %v706 = vld [vmem:[#allocation8 + $0x30] sm:$0xf]
          %v707 = vld [vmem:[#allocation8 + $0x34] sm:$0xf]
          %v708 = vld [vmem:[#allocation8 + $0x38] sm:$0xf]
          %v709 = vld [vmem:[#allocation8 + $0x3c] sm:$0xf]
          %v710 = vld [vmem:[%s8] sm:$0x1]
          %v711 = vmul.f32 %v710, 20.0
          %v713 = vlaneseq
          %v714 = vshrl.u32 %v713, 7
          %v715 = vsub.s32 0, %v714
          %v716 = vrot.slane %v711, %v715
          %v734 = vunpack.c.l.b16 %v694
          %v735 = vunpack.c.l.b16 %v695
          %v736 = vunpack.c.l.b16 %v696
          %v737 = vunpack.c.l.b16 %v697
          %v738 = vunpack.c.l.b16 %v698
          %v739 = vunpack.c.l.b16 %v699
          %v740 = vunpack.c.l.b16 %v700
          %v741 = vunpack.c.l.b16 %v701
          %v742 = vunpack.c.l.b16 %v702
          %v743 = vunpack.c.l.b16 %v703
          %v744 = vunpack.c.l.b16 %v704
          %v745 = vunpack.c.l.b16 %v705
          %v746 = vunpack.c.l.b16 %v706
          %v747 = vunpack.c.l.b16 %v707
          %v748 = vunpack.c.l.b16 %v708
          %v749 = vunpack.c.l.b16 %v709
          %v750 = vpack.c.b16 %v735, %v734
          %v751 = vpack.c.b16 %v737, %v736
          %v752 = vpack.c.b16 %v739, %v738
          %v753 = vpack.c.b16 %v741, %v740
          %v754 = vpack.c.b16 %v743, %v742
          %v755 = vpack.c.b16 %v745, %v744
          %v756 = vpack.c.b16 %v747, %v746
          %v757 = vpack.c.b16 %v749, %v748
          %766 = vmatprep.subr.bf16.mxu0 0
          %767 = vmatpush1.bf16.msra.mxu0 %v750
          %768 = vmatprep.subr.bf16.mxu0 0
          %769 = vmatpush1.bf16.msra.mxu0 %v751
          %770 = vmatprep.subr.bf16.mxu0 0
          %771 = vmatpush1.bf16.msra.mxu0 %v752
          %772 = vmatprep.subr.bf16.mxu0 0
          %773 = vmatpush1.bf16.msra.mxu0 %v753
          %774 = vmatprep.subr.bf16.mxu0 0
          %775 = vmatpush1.bf16.msra.mxu0 %v754
          %776 = vmatprep.subr.bf16.mxu0 0
          %777 = vmatpush1.bf16.msra.mxu0 %v755
          %778 = vmatprep.subr.bf16.mxu0 0
          %779 = vmatpush1.bf16.msra.mxu0 %v756
          %780 = vmatprep.subr.bf16.mxu0 0
          %781 = vmatpush1.bf16.msra.mxu0 %v757
          %782 = vmatprep.subr.bf16.mxu0 0
          %783 = vmatpush1.bf16.msra.mxu0 0
          %784 = vmatprep.subr.bf16.mxu0 0
          %785 = vmatpush1.bf16.msra.mxu0 0
          %786 = vmatprep.subr.bf16.mxu0 0
          %787 = vmatpush1.bf16.msra.mxu0 0
          %788 = vmatprep.subr.bf16.mxu0 0
          %789 = vmatpush1.bf16.msra.mxu0 0
          %790 = vmatprep.subr.bf16.mxu0 0
          %791 = vmatpush1.bf16.msra.mxu0 0
          %792 = vmatprep.subr.bf16.mxu0 0
          %793 = vmatpush1.bf16.msra.mxu0 0
          %794 = vmatprep.subr.bf16.mxu0 0
          %795 = vmatpush1.bf16.msra.mxu0 0
          %796 = vmatprep.subr.bf16.mxu0 0
          %797 = vmatpush1.bf16.msra.mxu0 0
          %798 = vmatprep.mubr.bf16.mxu0 0
          %799 = vmatmul.mubr.bf16.gmra.mrb[0].mxu0 %v693
          %v800 = vpop.f32.mrb[0].mxu0
          %v801 = vadd.f32 %v716, %v800
          %v802 = vpop.f32.mrb[0].mxu0
          %v803 = vpop.f32.mrb[0].mxu0
          %v804 = vpop.f32.mrb[0].mxu0
          %805 = vdwg.mxu0
          %v806 = vpack.c.bf16 %v801, %v801
          %v823 = vunpack.c.l.b16 %v676
          %v824 = vunpack.c.l.b16 %v677
          %v825 = vunpack.c.l.b16 %v678
          %v826 = vunpack.c.l.b16 %v679
          %v827 = vunpack.c.l.b16 %v680
          %v828 = vunpack.c.l.b16 %v681
          %v829 = vunpack.c.l.b16 %v682
          %v830 = vunpack.c.l.b16 %v683
          %v831 = vunpack.c.l.b16 %v684
          %v832 = vunpack.c.l.b16 %v685
          %v833 = vunpack.c.l.b16 %v686
          %v834 = vunpack.c.l.b16 %v687
          %v835 = vunpack.c.l.b16 %v688
          %v836 = vunpack.c.l.b16 %v689
          %v837 = vunpack.c.l.b16 %v690
          %v838 = vunpack.c.l.b16 %v691
          %v839 = vpack.c.b16 %v824, %v823
          %v840 = vpack.c.b16 %v826, %v825
          %v841 = vpack.c.b16 %v828, %v827
          %v842 = vpack.c.b16 %v830, %v829
          %v843 = vpack.c.b16 %v832, %v831
          %v844 = vpack.c.b16 %v834, %v833
          %v845 = vpack.c.b16 %v836, %v835
          %v846 = vpack.c.b16 %v838, %v837
          %855 = vmatprep.subr.bf16.mxu0 0
          %856 = vmatpush1.bf16.xpose.msra.mxu0 %v839
          %857 = vmatprep.subr.bf16.mxu0 0
          %858 = vmatpush1.bf16.xpose.msra.mxu0 %v840
          %859 = vmatprep.subr.bf16.mxu0 0
          %860 = vmatpush1.bf16.xpose.msra.mxu0 %v841
          %861 = vmatprep.subr.bf16.mxu0 0
          %862 = vmatpush1.bf16.xpose.msra.mxu0 %v842
          %863 = vmatprep.subr.bf16.mxu0 0
          %864 = vmatpush1.bf16.xpose.msra.mxu0 %v843
          %865 = vmatprep.subr.bf16.mxu0 0
          %866 = vmatpush1.bf16.xpose.msra.mxu0 %v844
          %867 = vmatprep.subr.bf16.mxu0 0
          %868 = vmatpush1.bf16.xpose.msra.mxu0 %v845
          %869 = vmatprep.subr.bf16.mxu0 0
          %870 = vmatpush1.bf16.xpose.msra.mxu0 %v846
          %871 = vmatprep.subr.bf16.mxu0 0
          %872 = vmatpush1.bf16.xpose.msra.mxu0 0
          %873 = vmatprep.subr.bf16.mxu0 0
          %874 = vmatpush1.bf16.xpose.msra.mxu0 0
          %875 = vmatprep.subr.bf16.mxu0 0
          %876 = vmatpush1.bf16.xpose.msra.mxu0 0
          %877 = vmatprep.subr.bf16.mxu0 0
          %878 = vmatpush1.bf16.xpose.msra.mxu0 0
          %879 = vmatprep.subr.bf16.mxu0 0
          %880 = vmatpush1.bf16.xpose.msra.mxu0 0
          %881 = vmatprep.subr.bf16.mxu0 0
          %882 = vmatpush1.bf16.xpose.msra.mxu0 0
          %883 = vmatprep.subr.bf16.mxu0 0
          %884 = vmatpush1.bf16.xpose.msra.mxu0 0
          %885 = vmatprep.subr.bf16.mxu0 0
          %886 = vmatpush1.bf16.xpose.msra.mxu0 0
          %887 = vmatprep.mubr.bf16.mxu0 0
          %888 = vmatmul.mubr.bf16.gmra.mrb[0].mxu0 %v806
          %v889 = vpop.f32.mrb[0].mxu0
          %v890 = vadd.f32 0.0, %v889
          %v891 = vpop.f32.mrb[0].mxu0
          %v892 = vpop.f32.mrb[0].mxu0
          %v893 = vpop.f32.mrb[0].mxu0
          %894 = vdwg.mxu0
          %v895 = vmul.f32 %v890, 0.088388346
          %vm896 = vcmask 1041408
          %v897 = vsel %vm896, %v895, -inf
          %898 = vmax.xlane.f32.xlu0 %v897
          %v899 = vpop.xlane.xlu0 %898
          %v900 = vsub.f32 %v895, %v899
          %v901 = vmul.f32 %v900, 1.442695
          %v902 = vpow.pop %v901
          %v903 = vsel %vm896, %v902, 0.0
          %904 = vadd.xlane.f32.xlu0 %v903
          %v905 = vpop.xlane.xlu0 %904
          %v906 = vrcp.pop %v905
          %v907 = vmul.f32 %v902, %v906
          %v908 = vpack.c.bf16 %v907, %v907
          %909 = vmatprep.subr.bf16.mxu0 0
          %910 = vmatpush1.bf16.msra.mxu0 %v839
          %911 = vmatprep.subr.bf16.mxu0 0
          %912 = vmatpush1.bf16.msra.mxu0 %v840
          %913 = vmatprep.subr.bf16.mxu0 0
          %914 = vmatpush1.bf16.msra.mxu0 %v841
          %915 = vmatprep.subr.bf16.mxu0 0
          %916 = vmatpush1.bf16.msra.mxu0 %v842
          %917 = vmatprep.subr.bf16.mxu0 0
          %918 = vmatpush1.bf16.msra.mxu0 %v843
          %919 = vmatprep.subr.bf16.mxu0 0
          %920 = vmatpush1.bf16.msra.mxu0 %v844
          %921 = vmatprep.subr.bf16.mxu0 0
          %922 = vmatpush1.bf16.msra.mxu0 %v845
          %923 = vmatprep.subr.bf16.mxu0 0
          %924 = vmatpush1.bf16.msra.mxu0 %v846
          %925 = vmatprep.subr.bf16.mxu0 0
          %926 = vmatpush1.bf16.msra.mxu0 0
          %927 = vmatprep.subr.bf16.mxu0 0
          %928 = vmatpush1.bf16.msra.mxu0 0
          %929 = vmatprep.subr.bf16.mxu0 0
          %930 = vmatpush1.bf16.msra.mxu0 0
          %931 = vmatprep.subr.bf16.mxu0 0
          %932 = vmatpush1.bf16.msra.mxu0 0
          %933 = vmatprep.subr.bf16.mxu0 0
          %934 = vmatpush1.bf16.msra.mxu0 0
          %935 = vmatprep.subr.bf16.mxu0 0
          %936 = vmatpush1.bf16.msra.mxu0 0
          %937 = vmatprep.subr.bf16.mxu0 0
          %938 = vmatpush1.bf16.msra.mxu0 0
          %939 = vmatprep.subr.bf16.mxu0 0
          %940 = vmatpush1.bf16.msra.mxu0 0
          %941 = vmatprep.mubr.bf16.mxu0 0
          %942 = vmatmul.mubr.bf16.gmra.mrb[0].mxu0 %v908
          %v943 = vpop.f32.mrb[0].mxu0
          %v944 = vadd.f32 0.0, %v943
          %v945 = vpop.f32.mrb[0].mxu0
          %v946 = vpop.f32.mrb[0].mxu0
          %v947 = vpop.f32.mrb[0].mxu0
          %948 = vdwg.mxu0
          %v949 = vmul.f32 %v944, %v944
          %v950 = vsel %vm896, %v949, 0.0
          %951 = vadd.xlane.f32.xlu0 %v950
          %v952 = vpop.xlane.xlu0 %951
          %v953 = vrsqrt.pop %v952
          %v954 = vmul.f32 %v952, %v953
          %vm955 = vcmp.eq.f32.partialorder %v952, inf
          %v956 = vsel %vm955, %v952, %v954
          %vm957 = vcmp.eq.f32.partialorder %v952, 0.0
          %v958 = vand.u32 %v952, 2147483648
          %v959 = vsel %vm957, %v958, %v956
          %v960 = vadd.f32 %v959, 1e-10
          %v961 = vrcp.pop %v960
          %v962 = vmul.f32 %v944, %v961
          %963 = vst [vmem:[#allocation11] sm:$0x3] %v907
          %964 = vst [vmem:[#allocation12] sm:$0x3] %v962
        $region84: #{tpu_custom_call.1} parent=59 // pred_fallthru
          _
        // Predicated region
        $region85: #{tpu_custom_call.1} parent=59 // pred_check
          %p965 = pneg %p277
        $region86: #{tpu_custom_call.1} parent=59 // pred_check_branch
          %967 = sbr.rel (%p965) target = $region88
        $region87: #{tpu_custom_call.1} parent=59 // pred_region
          %s969 = ssub.s32 32, 32
          %970 = vsyncadd [#allocation5], %s969
          %s971 = smul.addr %s34, 32
          %s972 = scalar_lea.hbm %s10, %s971
          %s974 = sshll.u32 [#allocation11], 4
          %s975 = int_to_ptr.vmem [resolvable:$true] %s974
          %977 = dma.vmem_to_hbm [thread:$0]  %s975, 32, %s972, [#allocation5]
        $region88: #{tpu_custom_call.1} parent=59 // pred_fallthru
          _
        // Predicated region
        $region89: #{tpu_custom_call.1} parent=59 // pred_check
          %p978 = pneg %p303
        $region90: #{tpu_custom_call.1} parent=59 // pred_check_branch
          %980 = sbr.rel (%p978) target = $region92
        $region91: #{tpu_custom_call.1} parent=59 // pred_region
          %s982 = ssub.s32 32, 32
          %983 = vsyncadd [#allocation13], %s982
          %s984 = smul.addr %s34, 32
          %s985 = scalar_lea.hbm %s11, %s984
          %s987 = sshll.u32 [#allocation12], 4
          %s988 = int_to_ptr.vmem [resolvable:$true] %s987
          %990 = dma.vmem_to_hbm [thread:$0]  %s988, 32, %s985, [#allocation13]
        $region92: #{tpu_custom_call.1} parent=59 // pred_fallthru
          _
        // Predicated region
        $region93: #{tpu_custom_call.1} parent=59 // pred_check
          %p991 = pneg %p277
        $region94: #{tpu_custom_call.1} parent=59 // pred_check_branch
          %993 = sbr.rel (%p991) target = $region96
        $region95: #{tpu_custom_call.1} parent=59 // pred_region
          %994 = dma.done [#allocation5], 32
        $region96: #{tpu_custom_call.1} parent=59 // pred_fallthru
          _
        // Predicated region
        $region97: #{tpu_custom_call.1} parent=59 // pred_check
          %p995 = pneg %p303
        $region98: #{tpu_custom_call.1} parent=59 // pred_check_branch
          %997 = sbr.rel (%p995) target = $region100
        $region99: #{tpu_custom_call.1} parent=59 // pred_region
          %998 = dma.done [#allocation13], 32
        $region100: #{tpu_custom_call.1} parent=59 // pred_fallthru
          _
      $region60: #{tpu_custom_call.1} parent=5 // pred_fallthru
        _
      %p999 = scmp.le.s32.totalorder 2, %s25
      // Predicated region
      $region101: #{tpu_custom_call.1} parent=5 // pred_check
        %p1000 = pneg %p999
      $region102: #{tpu_custom_call.1} parent=5 // pred_check_branch
        %1002 = sbr.rel (%p1000) target = $region104
      $region103: #{tpu_custom_call.1} parent=5 // pred_region
        %s1003 = ssub.s32 %s25, 2
      $region104: #{tpu_custom_call.1} parent=5 // pred_fallthru
        _
    $region6: #{tpu_custom_call.1} parent=1 // loop_footer
      %s29 = sadd.s32 1, %s25
    $region7: #{tpu_custom_call.1} parent=1 // loop_footer_branch
      %24 = sbr.rel target = $region3
    $region8: #{tpu_custom_call.1} parent=1 // loop_exit
      _
    %1004 = vsyncpa [#allocation4], 1
    %s1005 = scalar_lea.sflag [#allocation4], 1
    %1006 = vsyncpa %s1005, 1
    %1007 = vsyncpa [#allocation7], 1
    %1008 = vsyncpa [#allocation10], 1
    %1009 = vsyncpa [#allocation5], 1
    %s1010 = scalar_lea.sflag [#allocation5], 1
    %1011 = vsyncpa %s1010, 1
    %1012 = vsyncpa [#allocation13], 1

</llo_original>
